<compile_context>
chip_gen: v6e
topology: v6e:2x2x1
jax: 0.10.0
libtpu: 0.0.40
codegen_flags: <defaults>
</compile_context>

<pallas_src>
import jax
import jax.numpy as jnp
from jax.experimental import pallas as pl
from jax.experimental.pallas import tpu as pltpu


def _linear_add_kernel(x_ref, wtb_ref, o_ref):
    # x_ref:   SMEM (IN,)        scalars of the single input row
    # wtb_ref: VMEM (IN+1, OUT)  rows 0..IN-1 = W.T, row IN = (bias + other)
    # o_ref:   VMEM (1, OUT)
    in_f = wtb_ref.shape[0] - 1
    acc = wtb_ref[in_f:in_f + 1, :]                  # init with fused bias+other
    for i in range(in_f):                            # static unroll: VPU only
        acc = acc + x_ref[i] * wtb_ref[i:i + 1, :]   # scalar-broadcast FMA
    o_ref[...] = acc.astype(o_ref.dtype)


def prepare_params(weight, bias, other):
    """One-time packing (run at parameter-init time, NOT per forward call).

    weight: (OUT, IN), bias: (OUT,), other: (OUT,)
    returns wtb: (IN+1, OUT) float32 = [W.T ; bias + other]
    """
    wt = weight.T.astype(jnp.float32)                          # (IN, OUT)
    bo = (bias + other).reshape(1, weight.shape[0])            # (1, OUT)
    return jnp.concatenate([wt, bo.astype(jnp.float32)], axis=0)


@jax.jit
def model_forward(x1, x2, wtb):
    # x1: (1, IN), x2: unused by the reference forward, wtb: (IN+1, OUT)
    del x2
    if x1.shape[0] != 1:
        raise ValueError(
            "reference forward (.transpose(0,1).view(out_features)) requires "
            f"batch == 1, got batch == {x1.shape[0]}"
        )
    in_f = x1.shape[1]
    out_f = wtb.shape[1]
    assert wtb.shape[0] == in_f + 1

    x_flat = x1.reshape(in_f).astype(jnp.float32)   # scalars for SMEM

    out = pl.pallas_call(
        _linear_add_kernel,
        out_shape=jax.ShapeDtypeStruct((1, out_f), jnp.float32),
        in_specs=[
            pl.BlockSpec(memory_space=pltpu.MemorySpace.SMEM),
            pl.BlockSpec(memory_space=pltpu.MemorySpace.VMEM),
        ],
        out_specs=pl.BlockSpec(memory_space=pltpu.MemorySpace.VMEM),
        cost_estimate=pl.CostEstimate(
            flops=2 * in_f * out_f, transcendentals=0, bytes_accessed=128
        ),
    )(x_flat, wtb)

    # v3 = v1.transpose(0,1).view(4) + other  ->  flatten (1, OUT) to (OUT,)
    return out.reshape(out_f)


if __name__ == "__main__":
    key = jax.random.PRNGKey(0)
    k_x1, k_x2, k_w, k_b, k_o = jax.random.split(key, 5)

    IN_F, OUT_F = 3, 4

    # The reference forward is only valid for batch == 1 (see header comment).
    x1 = jax.random.normal(k_x1, (1, IN_F), dtype=jnp.float32)
    x2 = jax.random.normal(k_x2, (1, IN_F), dtype=jnp.float32)  # unused

    # Deterministic synthetic parameters (nn.Linear(3, 4) + Parameter(randn(4)))
    bound = 1.0 / (IN_F ** 0.5)
    weight = jax.random.uniform(k_w, (OUT_F, IN_F), jnp.float32, -bound, bound)
    bias = jax.random.uniform(k_b, (OUT_F,), jnp.float32, -bound, bound)
    other = jax.random.normal(k_o, (OUT_F,), dtype=jnp.float32)

    # One-time parameter packing (hoisted out of the per-call path).
    wtb = jax.block_until_ready(prepare_params(weight, bias, other))

    out = model_forward(x1, x2, wtb)
    jax.block_until_ready(out)

    # Cross-check against plain JAX reference
    ref = (x1 @ weight.T + bias).reshape(OUT_F) + other
    assert out.shape == (OUT_F,)
    assert jnp.allclose(out, ref, atol=1e-5), (out, ref)

    print("KERNEL_OK")
</pallas_src>

<mosaic_0001>
module attributes {stable_mosaic.version = 11 : i64} {
  func.func @_linear_add_kernel(%arg0: memref<3xf32, #tpu.memory_space<smem>>, %arg1: memref<4x4xf32, #tpu.memory_space<vmem>>, %arg2: memref<1x4xf32, #tpu.memory_space<vmem>>) attributes {dimension_semantics = [], scalar_prefetch = 0 : i64, scratch_operands = 0 : i64, tpu.core_type = #tpu.core_type<tc>} {
    %c3 = arith.constant 3 : index
    %c0 = arith.constant 0 : index
    %0 = vector.load %arg1[%c3, %c0] : memref<4x4xf32, #tpu.memory_space<vmem>>, vector<1x4xf32>
    %c0_0 = arith.constant 0 : index
    %1 = memref.load %arg0[%c0_0] : memref<3xf32, #tpu.memory_space<smem>>
    %c0_1 = arith.constant 0 : index
    %c0_2 = arith.constant 0 : index
    %2 = vector.load %arg1[%c0_1, %c0_2] : memref<4x4xf32, #tpu.memory_space<vmem>>, vector<1x4xf32>
    %3 = vector.broadcast %1 : f32 to vector<1x4xf32>
    %4 = arith.mulf %3, %2 : vector<1x4xf32>
    %5 = arith.addf %0, %4 : vector<1x4xf32>
    %c1 = arith.constant 1 : index
    %6 = memref.load %arg0[%c1] : memref<3xf32, #tpu.memory_space<smem>>
    %c1_3 = arith.constant 1 : index
    %c0_4 = arith.constant 0 : index
    %7 = vector.load %arg1[%c1_3, %c0_4] : memref<4x4xf32, #tpu.memory_space<vmem>>, vector<1x4xf32>
    %8 = vector.broadcast %6 : f32 to vector<1x4xf32>
    %9 = arith.mulf %8, %7 : vector<1x4xf32>
    %10 = arith.addf %5, %9 : vector<1x4xf32>
    %c2 = arith.constant 2 : index
    %11 = memref.load %arg0[%c2] : memref<3xf32, #tpu.memory_space<smem>>
    %c2_5 = arith.constant 2 : index
    %c0_6 = arith.constant 0 : index
    %12 = vector.load %arg1[%c2_5, %c0_6] : memref<4x4xf32, #tpu.memory_space<vmem>>, vector<1x4xf32>
    %13 = vector.broadcast %11 : f32 to vector<1x4xf32>
    %14 = arith.mulf %13, %12 : vector<1x4xf32>
    %15 = arith.addf %10, %14 : vector<1x4xf32>
    %c0_7 = arith.constant 0 : index
    %c0_8 = arith.constant 0 : index
    %16 = vector.load %arg2[%c0_7, %c0_8] : memref<1x4xf32, #tpu.memory_space<vmem>>, vector<1x4xf32>
    tpu.vector_store %arg2[%c0_7, %c0_8], %15 {strides = array<i32>} : memref<1x4xf32, #tpu.memory_space<vmem>>, vector<1x4xf32>,
    return
  }
}

</mosaic_0001>

<llo_original>
// kernel: model_forward.1
$region0: #{model_forward.1}
  #allocation0 [shape = 'u32[]', space=smem, size = 0x4, offset = 0x4, fixed_abs, tag = 'smem constant byte address 0x4 - core index']
  #allocation1 [shape = 'u32[144,128]{1,0:T(1,128)}', space=vmem, size = 0x12000, scoped, tag = 'internal scratch']
  %s0 = inlined_call_operand.vmem [shape: f32[3], index: 0, kind: input, shape index: {}]
  %s1 = inlined_call_operand.hbm [shape: f32[4,4], index: 1, kind: input, shape index: {}]
  %s2 = inlined_call_operand.hbm [shape: f32[1,4], index: 2, kind: output, shape index: {}]
  %s3 = sld [smem:[#allocation0]]
  $region26: #{model_forward.1} parent=0
    _
  %s5 = ssub.s32 1, %s3
  %s6 = scalar_select 0, %s5, %s3
  $region1: #{model_forward.1} parent=0
    #allocation2 [shape = 'u8[512]{0}', space=smem, size = 0x200, scoped, tag = 'input window, operand 0, single buffered']
    #allocation3 [shape = 's32[1]{0}', space=sflag, size = 0x4, scoped, tag = 'scoped memory for model_forward.1']
    #allocation4 [shape = 's32[1]{0}', space=sflag, size = 0x4, scoped, tag = 'scoped memory for model_forward.1']
    #allocation5 [shape = 's32[1]{0}', space=sflag, size = 0x4, scoped, tag = 'scoped memory for model_forward.1']
    #allocation6 [shape = 'u8[2048]{0}', space=vmem, size = 0x800, scoped, tag = 'input window, operand 1, single buffered']
    #allocation7 [shape = 'u8[512]{0}', space=vmem, size = 0x400, scoped, tag = 'output window, operand 0, single buffered']
    %7 = vsyncpa [#allocation5], 0
    %8 = vsyncpa [#allocation3], 0
    %9 = vsyncpa [#allocation4], 0
    // Predicated region
    $region2: #{model_forward.1} parent=1 // pred_check
      _
    $region3: #{model_forward.1} parent=1 // pred_check_branch
      %11 = sbr.rel (0) target = $region5
    $region4: #{model_forward.1} parent=1 // pred_region
      %s13 = ssub.s32 16, 16
      %14 = vsyncadd [#allocation5], %s13
      %s16 = sshll.u32 %s0, 4
      %s17 = int_to_ptr.vmem [resolvable:$true] %s16
      %19 = dma.vmem_to_smem %s17, 16, [#allocation2], [#allocation5]
    $region5: #{model_forward.1} parent=1 // pred_fallthru
      _
    // Predicated region
    $region6: #{model_forward.1} parent=1 // pred_check
      _
    $region7: #{model_forward.1} parent=1 // pred_check_branch
      %21 = sbr.rel (0) target = $region9
    $region8: #{model_forward.1} parent=1 // pred_region
      %s23 = ssub.s32 64, 64
      %24 = vsyncadd [#allocation3], %s23
      %s26 = sshll.u32 [#allocation6], 4
      %s27 = int_to_ptr.vmem [resolvable:$true] %s26
      %29 = dma.hbm_to_vmem [thread:$0]  %s1, 64, %s27, [#allocation3]
    $region9: #{model_forward.1} parent=1 // pred_fallthru
      _
    // Predicated region
    $region10: #{model_forward.1} parent=1 // pred_check
      _
    $region11: #{model_forward.1} parent=1 // pred_check_branch
      %31 = sbr.rel (0) target = $region13
    $region12: #{model_forward.1} parent=1 // pred_region
      %32 = dma.done [#allocation5], 16
    $region13: #{model_forward.1} parent=1 // pred_fallthru
      _
    // Predicated region
    $region14: #{model_forward.1} parent=1 // pred_check
      _
    $region15: #{model_forward.1} parent=1 // pred_check_branch
      %34 = sbr.rel (0) target = $region17
    $region16: #{model_forward.1} parent=1 // pred_region
      %35 = dma.done [#allocation3], 64
    $region17: #{model_forward.1} parent=1 // pred_fallthru
      _
    %36 = sfence
    %v37 = vld [vmem:[#allocation6 + $0x3] sm:$0x1]
    %s38 = sld [smem:[#allocation2]]
    %v39 = vld [vmem:[#allocation6] sm:$0x1]
    %v40 = vstv %s38
    %v41 = vmul.f32 %v40, %v39
    %v42 = vadd.f32 %v37, %v41
    %s43 = sld [smem:[#allocation2 + $0x1]]
    %v44 = vld [vmem:[#allocation6 + $0x1] sm:$0x1]
    %v45 = vstv %s43
    %v46 = vmul.f32 %v45, %v44
    %v47 = vadd.f32 %v42, %v46
    %s48 = sld [smem:[#allocation2 + $0x2]]
    %v49 = vld [vmem:[#allocation6 + $0x2] sm:$0x1]
    %v50 = vstv %s48
    %v51 = vmul.f32 %v50, %v49
    %v52 = vadd.f32 %v47, %v51
    %vm53 = vcmask 24576
    %54 = vst.msk [vmem:[#allocation7] sm:$0x1] %vm53, %v52
    // Predicated region
    $region18: #{model_forward.1} parent=1 // pred_check
      _
    $region19: #{model_forward.1} parent=1 // pred_check_branch
      %56 = sbr.rel (0) target = $region21
    $region20: #{model_forward.1} parent=1 // pred_region
      %s58 = ssub.s32 16, 16
      %59 = vsyncadd [#allocation4], %s58
      %s61 = sshll.u32 [#allocation7], 4
      %s62 = int_to_ptr.vmem [resolvable:$true] %s61
      %64 = dma.vmem_to_hbm [thread:$0]  %s62, 16, %s2, [#allocation4]
    $region21: #{model_forward.1} parent=1 // pred_fallthru
      _
    // Predicated region
    $region22: #{model_forward.1} parent=1 // pred_check
      _
    $region23: #{model_forward.1} parent=1 // pred_check_branch
      %66 = sbr.rel (0) target = $region25
    $region24: #{model_forward.1} parent=1 // pred_region
      %67 = dma.done [#allocation4], 16
    $region25: #{model_forward.1} parent=1 // pred_fallthru
      _
    %68 = vsyncpa [#allocation3], 1
    %69 = vsyncpa [#allocation4], 1
    %70 = vsyncpa [#allocation5], 1

</llo_original>
